<compile_context>
chip_gen: v7x
topology: tpu7x:2x2x1
jax: 0.10.0
libtpu: 0.0.40
codegen_flags: <defaults>
</compile_context>

<pallas_src>
import functools

import jax
import jax.numpy as jnp
from jax.experimental import pallas as pl
from jax.experimental.pallas import tpu as pltpu


# ----------------------------------------------------------------------------
# Pallas kernel: one batch element per grid step, everything else fused.
# ----------------------------------------------------------------------------
def _dcgru_cell_kernel(p_ref, xh_ref, h_ref, wg_ref, wc_ref, bg_ref, bc_ref,
                       hout_ref, *, K: int, N: int, D: int, H: int):
    """Fused DCGRU cell for one batch element.

      p_ref   : (K*N, N)        bf16  stacked diffusion supports (resident)
      xh_ref  : (N, D+H)        bf16  [x | h] for this batch element
      h_ref   : (N, H)          f32   full-precision hidden state
      wg_ref  : (K*(D+H), 2H)   bf16  conv_gate.W   (resident)
      wc_ref  : (K*(D+H), H)    bf16  conv_cand.W   (resident)
      bg_ref  : (1, 2H)         f32
      bc_ref  : (1, H)          f32
      hout_ref: (N, H)          f32
    """
    p = p_ref[...]                      # (K*N, N)
    xh = xh_ref[...]                    # (N, D+H)
    h = h_ref[...]                      # (N, H) f32 -- gating math stays f32

    # --- one diffusion GEMM for ALL supports and the fused [x|h] signal ---
    sup = jnp.dot(p, xh, preferred_element_type=jnp.float32)   # (K*N, D+H)
    sup_b = sup.astype(jnp.bfloat16)

    # Concat-over-supports layout so the weight GEMM contracts over the full
    # K*(D+H) depth (single deep MXU contraction instead of 2K shallow ones).
    sup_cat = jnp.concatenate(
        [sup_b[k * N:(k + 1) * N, :] for k in range(K)], axis=-1)  # (N, K*(D+H))

    # --- fused z|r gate GEMM + one sigmoid over the (N, 2H) block ---
    zr = jax.nn.sigmoid(
        jnp.dot(sup_cat, wg_ref[...], preferred_element_type=jnp.float32)
        + bg_ref[...])                                             # (N, 2H)
    z = zr[:, :H]
    r = zr[:, H:]

    # --- candidate GCN on [x, r*h]: only the h-part of the support changes ---
    rh_b = (r * h).astype(jnp.bfloat16)                            # (N, H)
    prh = jnp.dot(p, rh_b,
                  preferred_element_type=jnp.float32).astype(jnp.bfloat16)  # (K*N, H)

    cand_slabs = []
    for k in range(K):                                   # K=3, unrolled
        cand_slabs.append(sup_b[k * N:(k + 1) * N, :D])  # P_k @ x (reused)
        cand_slabs.append(prh[k * N:(k + 1) * N, :])     # P_k @ (r*h)
    cand_cat = jnp.concatenate(cand_slabs, axis=-1)      # (N, K*(D+H))

    c = jnp.tanh(
        jnp.dot(cand_cat, wc_ref[...], preferred_element_type=jnp.float32)
        + bc_ref[...])                                   # (N, H)

    # --- GRU state update in f32 (no re-rounding of the recurrent state) ---
    hout_ref[...] = (1.0 - z) * h + z * c


# ----------------------------------------------------------------------------
# Wrapper: layout plumbing (cheap XLA ops) + pallas_call
# ----------------------------------------------------------------------------
@jax.jit
def dcgru_cell(P, x_t, h_t_1, w_gate, b_gate, w_cand, b_cand):
    """DCGRU_Cell.forward.

    P:(K,N,N)  x_t:(B,N,D)  h_t_1:(B,N,H)
    w_gate:(K*(D+H), 2H)  b_gate:(2H,)  w_cand:(K*(D+H), H)  b_cand:(H,)
    returns h_t:(B,N,H) float32
    """
    K, N, _ = P.shape
    B, _, D = x_t.shape
    H = h_t_1.shape[-1]
    DH = D + H

    # MXU operands in bf16; gating math stays f32 (h passed separately in f32).
    p_rows = P.reshape(K * N, N).astype(jnp.bfloat16)                   # (K*N, N)
    xh = jnp.concatenate([x_t, h_t_1], axis=-1).astype(jnp.bfloat16)    # (B, N, D+H)
    h_f32 = h_t_1.astype(jnp.float32)                                   # (B, N, H)
    wg = w_gate.astype(jnp.bfloat16)                                    # (K*DH, 2H)
    wc = w_cand.astype(jnp.bfloat16)                                    # (K*DH, H)
    bg = b_gate.reshape(1, 2 * H).astype(jnp.float32)
    bc = b_cand.reshape(1, H).astype(jnp.float32)

    # Advisory cost estimate for XLA scheduling around the custom call.
    flops = 2 * B * (K * N * N * DH          # gate diffusion  P @ [x|h]
                     + K * N * N * H         # cand diffusion  P @ (r*h)
                     + N * K * DH * 2 * H    # gate weight GEMM
                     + N * K * DH * H)       # cand weight GEMM
    transcendentals = B * N * 3 * H          # sigmoid(2H) + tanh(H) per row
    bytes_accessed = (p_rows.size * 2 + xh.size * 2 + h_f32.size * 4
                      + wg.size * 2 + wc.size * 2 + bg.size * 4 + bc.size * 4
                      + B * N * H * 4)

    kern = functools.partial(_dcgru_cell_kernel, K=K, N=N, D=D, H=H)
    h_next = pl.pallas_call(
        kern,
        out_shape=jax.ShapeDtypeStruct((B, N, H), jnp.float32),
        grid=(B,),                                            # batch on the grid
        in_specs=[
            # Grid-invariant blocks (constant index_map): DMA'd once, resident.
            pl.BlockSpec((K * N, N), lambda b: (0, 0)),        # P (stacked)
            pl.BlockSpec((None, N, DH), lambda b: (b, 0, 0)),  # [x|h] batch b
            pl.BlockSpec((None, N, H), lambda b: (b, 0, 0)),   # h (f32) batch b
            pl.BlockSpec((K * DH, 2 * H), lambda b: (0, 0)),   # W_gate
            pl.BlockSpec((K * DH, H), lambda b: (0, 0)),       # W_cand
            pl.BlockSpec((1, 2 * H), lambda b: (0, 0)),        # b_gate
            pl.BlockSpec((1, H), lambda b: (0, 0)),            # b_cand
        ],
        out_specs=pl.BlockSpec((None, N, H), lambda b: (b, 0, 0)),
        compiler_params=pltpu.CompilerParams(
            dimension_semantics=("parallel",),    # 2 TCs on v7x; pipelining elsewhere
            vmem_limit_bytes=32 * 1024 * 1024,    # well inside v7x's 64 MiB
        ),
        cost_estimate=pl.CostEstimate(
            flops=flops,
            transcendentals=transcendentals,
            bytes_accessed=bytes_accessed),
    )(p_rows, xh, h_f32, wg, wc, bg, bc)

    return h_next


# ----------------------------------------------------------------------------
# Pure-JAX reference (exact module math) for the built-in sanity check
# ----------------------------------------------------------------------------
def _ref_dcgru_cell(P, x, h, w_gate, b_gate, w_cand, b_cand):
    K = P.shape[0]
    H = h.shape[-1]

    def gcn(u, W, b):
        sup = jnp.concatenate(
            [jnp.einsum('ij,bjp->bip', P[k], u) for k in range(K)], axis=-1)
        return jnp.einsum('bip,pq->biq', sup, W) + b

    xh = jnp.concatenate([x, h], axis=-1)
    zr = gcn(xh, w_gate, b_gate)
    z = jax.nn.sigmoid(zr[..., :H])
    r = jax.nn.sigmoid(zr[..., H:])
    c = jnp.tanh(gcn(jnp.concatenate([x, r * h], axis=-1), w_cand, b_cand))
    return (1.0 - z) * h + z * c


def _xavier_normal(key, shape):
    fan_in, fan_out = shape
    std = (2.0 / (fan_in + fan_out)) ** 0.5
    return std * jax.random.normal(key, shape, dtype=jnp.float32)


# ----------------------------------------------------------------------------
if __name__ == "__main__":
    # batch, nodes, input_dim, hidden_dim, num diffusion supports
    B, N, D, H, K = 2, 16, 4, 32, 3

    key = jax.random.PRNGKey(0)
    kP, kx, kh, kwg, kwc, kbg, kbc = jax.random.split(key, 7)

    P = jax.random.uniform(kP, (K, N, N), dtype=jnp.float32)
    x_t = jax.random.normal(kx, (B, N, D), dtype=jnp.float32)
    h_t_1 = jax.random.normal(kh, (B, N, H), dtype=jnp.float32)

    w_gate = _xavier_normal(kwg, (K * (D + H), 2 * H))    # conv_gate.W
    w_cand = _xavier_normal(kwc, (K * (D + H), H))        # conv_cand.W
    b_gate = 0.1 * jax.random.normal(kbg, (2 * H,), dtype=jnp.float32)
    b_cand = 0.1 * jax.random.normal(kbc, (H,), dtype=jnp.float32)

    h_t = dcgru_cell(P, x_t, h_t_1, w_gate, b_gate, w_cand, b_cand)
    jax.block_until_ready(h_t)
    assert h_t.shape == (B, N, H)

    # (1) semantics check against the exact f32 module math; tolerance is
    #     loosened because the kernel feeds bf16 operands to the MXU.
    ref = _ref_dcgru_cell(P, x_t, h_t_1, w_gate, b_gate, w_cand, b_cand)
    assert jnp.allclose(h_t, ref, atol=1e-1, rtol=1e-1)

    # (2) tight check against the same math with inputs pre-rounded to bf16
    #     (isolates the Pallas restructuring from bf16 input rounding).
    bf = lambda a: a.astype(jnp.bfloat16).astype(jnp.float32)
    ref_bf = _ref_dcgru_cell(bf(P), bf(x_t), bf(h_t_1), bf(w_gate), b_gate,
                             bf(w_cand), b_cand)
    assert jnp.allclose(h_t, ref_bf, atol=3e-2, rtol=3e-2)

    print("KERNEL_OK")
</pallas_src>

<mosaic_0001>
module attributes {stable_mosaic.version = 11 : i64} {
  func.func @_dcgru_cell_kernel(%arg0: i32, %arg1: memref<48x16xbf16, #tpu.memory_space<vmem>>, %arg2: memref<1x16x36xbf16, #tpu.memory_space<vmem>>, %arg3: memref<1x16x32xf32, #tpu.memory_space<vmem>>, %arg4: memref<108x64xbf16, #tpu.memory_space<vmem>>, %arg5: memref<108x32xbf16, #tpu.memory_space<vmem>>, %arg6: memref<1x64xf32, #tpu.memory_space<vmem>>, %arg7: memref<1x32xf32, #tpu.memory_space<vmem>>, %arg8: memref<1x16x32xf32, #tpu.memory_space<vmem>>) attributes {dimension_semantics = [#tpu.dimension_semantics<parallel>], iteration_bounds = array<i64: 2>, scalar_prefetch = 0 : i64, scratch_operands = 0 : i64, tpu.core_type = #tpu.core_type<tc>, window_params = [{pipeline_mode = #tpu.pipeline_mode<synchronous>, transform_indices = @transform_0, window_bounds = array<i64: 48, 16>}, {transform_indices = @transform_1, window_bounds = array<i64: 1, 16, 36>}, {transform_indices = @transform_2, window_bounds = array<i64: 1, 16, 32>}, {pipeline_mode = #tpu.pipeline_mode<synchronous>, transform_indices = @transform_3, window_bounds = array<i64: 108, 64>}, {pipeline_mode = #tpu.pipeline_mode<synchronous>, transform_indices = @transform_4, window_bounds = array<i64: 108, 32>}, {pipeline_mode = #tpu.pipeline_mode<synchronous>, transform_indices = @transform_5, window_bounds = array<i64: 1, 64>}, {pipeline_mode = #tpu.pipeline_mode<synchronous>, transform_indices = @transform_6, window_bounds = array<i64: 1, 32>}, {transform_indices = @transform_7, window_bounds = array<i64: 1, 16, 32>}]} {
    %c0 = arith.constant 0 : index
    %c0_0 = arith.constant 0 : index
    %0 = vector.load %arg1[%c0, %c0_0] : memref<48x16xbf16, #tpu.memory_space<vmem>>, vector<48x16xbf16>
    %c0_1 = arith.constant 0 : index
    %c0_2 = arith.constant 0 : index
    %c0_3 = arith.constant 0 : index
    %1 = vector.load %arg2[%c0_1, %c0_2, %c0_3] : memref<1x16x36xbf16, #tpu.memory_space<vmem>>, vector<1x16x36xbf16>
    %2 = vector.shape_cast %1 : vector<1x16x36xbf16> to vector<16x36xbf16>
    %c0_4 = arith.constant 0 : index
    %c0_5 = arith.constant 0 : index
    %c0_6 = arith.constant 0 : index
    %3 = vector.load %arg3[%c0_4, %c0_5, %c0_6] : memref<1x16x32xf32, #tpu.memory_space<vmem>>, vector<1x16x32xf32>
    %4 = vector.shape_cast %3 : vector<1x16x32xf32> to vector<16x32xf32>
    %cst = arith.constant dense<0.000000e+00> : vector<48x36xf32>
    %5 = tpu.matmul %0, %2, %cst {dimension_numbers = #tpu.dot_dimension_numbers<[1], [0], [0], [1], [0, 0, 1, 1], [], []>} : vector<48x16xbf16>, vector<16x36xbf16>, vector<48x36xf32> -> vector<48x36xf32>
    %6 = arith.truncf %5 : vector<48x36xf32> to vector<48x36xbf16>
    %7 = vector.extract_strided_slice %6 {offsets = [0, 0], sizes = [16, 36], strides = [1, 1]} : vector<48x36xbf16> to vector<16x36xbf16>
    %8 = vector.extract_strided_slice %6 {offsets = [16, 0], sizes = [16, 36], strides = [1, 1]} : vector<48x36xbf16> to vector<16x36xbf16>
    %9 = vector.extract_strided_slice %6 {offsets = [32, 0], sizes = [16, 36], strides = [1, 1]} : vector<48x36xbf16> to vector<16x36xbf16>
    %10 = tpu.concatenate %7, %8, %9 in 1 : vector<16x36xbf16>, vector<16x36xbf16>, vector<16x36xbf16> -> vector<16x108xbf16>
    %c0_7 = arith.constant 0 : index
    %c0_8 = arith.constant 0 : index
    %11 = vector.load %arg4[%c0_7, %c0_8] : memref<108x64xbf16, #tpu.memory_space<vmem>>, vector<108x64xbf16>
    %cst_9 = arith.constant dense<0.000000e+00> : vector<16x64xf32>
    %12 = tpu.matmul %10, %11, %cst_9 {dimension_numbers = #tpu.dot_dimension_numbers<[1], [0], [0], [1], [0, 0, 1, 1], [], []>} : vector<16x108xbf16>, vector<108x64xbf16>, vector<16x64xf32> -> vector<16x64xf32>
    %c0_10 = arith.constant 0 : index
    %c0_11 = arith.constant 0 : index
    %13 = vector.load %arg6[%c0_10, %c0_11] : memref<1x64xf32, #tpu.memory_space<vmem>>, vector<1x64xf32>
    %14 = vector.broadcast %13 : vector<1x64xf32> to vector<16x64xf32>
    %15 = arith.addf %12, %14 : vector<16x64xf32>
    %16 = arith.negf %15 : vector<16x64xf32>
    %17 = math.exp %16 : vector<16x64xf32>
    %cst_12 = arith.constant 1.000000e+00 : f32
    %18 = vector.broadcast %cst_12 : f32 to vector<16x64xf32>
    %19 = arith.addf %18, %17 : vector<16x64xf32>
    %20 = arith.divf %18, %19 : vector<16x64xf32>
    %21 = vector.extract_strided_slice %20 {offsets = [0, 0], sizes = [16, 32], strides = [1, 1]} : vector<16x64xf32> to vector<16x32xf32>
    %22 = vector.extract_strided_slice %20 {offsets = [0, 32], sizes = [16, 32], strides = [1, 1]} : vector<16x64xf32> to vector<16x32xf32>
    %23 = arith.mulf %22, %4 : vector<16x32xf32>
    %24 = arith.truncf %23 : vector<16x32xf32> to vector<16x32xbf16>
    %cst_13 = arith.constant dense<0.000000e+00> : vector<48x32xf32>
    %25 = tpu.matmul %0, %24, %cst_13 {dimension_numbers = #tpu.dot_dimension_numbers<[1], [0], [0], [1], [0, 0, 1, 1], [], []>} : vector<48x16xbf16>, vector<16x32xbf16>, vector<48x32xf32> -> vector<48x32xf32>
    %26 = arith.truncf %25 : vector<48x32xf32> to vector<48x32xbf16>
    %27 = vector.extract_strided_slice %6 {offsets = [0, 0], sizes = [16, 4], strides = [1, 1]} : vector<48x36xbf16> to vector<16x4xbf16>
    %28 = vector.extract_strided_slice %26 {offsets = [0, 0], sizes = [16, 32], strides = [1, 1]} : vector<48x32xbf16> to vector<16x32xbf16>
    %29 = vector.extract_strided_slice %6 {offsets = [16, 0], sizes = [16, 4], strides = [1, 1]} : vector<48x36xbf16> to vector<16x4xbf16>
    %30 = vector.extract_strided_slice %26 {offsets = [16, 0], sizes = [16, 32], strides = [1, 1]} : vector<48x32xbf16> to vector<16x32xbf16>
    %31 = vector.extract_strided_slice %6 {offsets = [32, 0], sizes = [16, 4], strides = [1, 1]} : vector<48x36xbf16> to vector<16x4xbf16>
    %32 = vector.extract_strided_slice %26 {offsets = [32, 0], sizes = [16, 32], strides = [1, 1]} : vector<48x32xbf16> to vector<16x32xbf16>
    %33 = tpu.concatenate %27, %28, %29, %30, %31, %32 in 1 : vector<16x4xbf16>, vector<16x32xbf16>, vector<16x4xbf16>, vector<16x32xbf16>, vector<16x4xbf16>, vector<16x32xbf16> -> vector<16x108xbf16>
    %c0_14 = arith.constant 0 : index
    %c0_15 = arith.constant 0 : index
    %34 = vector.load %arg5[%c0_14, %c0_15] : memref<108x32xbf16, #tpu.memory_space<vmem>>, vector<108x32xbf16>
    %cst_16 = arith.constant dense<0.000000e+00> : vector<16x32xf32>
    %35 = tpu.matmul %33, %34, %cst_16 {dimension_numbers = #tpu.dot_dimension_numbers<[1], [0], [0], [1], [0, 0, 1, 1], [], []>} : vector<16x108xbf16>, vector<108x32xbf16>, vector<16x32xf32> -> vector<16x32xf32>
    %c0_17 = arith.constant 0 : index
    %c0_18 = arith.constant 0 : index
    %36 = vector.load %arg7[%c0_17, %c0_18] : memref<1x32xf32, #tpu.memory_space<vmem>>, vector<1x32xf32>
    %37 = vector.broadcast %36 : vector<1x32xf32> to vector<16x32xf32>
    %38 = arith.addf %35, %37 : vector<16x32xf32>
    %39 = math.tanh %38 : vector<16x32xf32>
    %cst_19 = arith.constant 1.000000e+00 : f32
    %40 = vector.broadcast %cst_19 : f32 to vector<16x32xf32>
    %41 = arith.subf %40, %21 : vector<16x32xf32>
    %42 = arith.mulf %41, %4 : vector<16x32xf32>
    %43 = arith.mulf %21, %39 : vector<16x32xf32>
    %44 = arith.addf %42, %43 : vector<16x32xf32>
    %c0_20 = arith.constant 0 : index
    %c0_21 = arith.constant 0 : index
    %c0_22 = arith.constant 0 : index
    %45 = vector.load %arg8[%c0_20, %c0_21, %c0_22] : memref<1x16x32xf32, #tpu.memory_space<vmem>>, vector<1x16x32xf32>
    %46 = vector.shape_cast %45 : vector<1x16x32xf32> to vector<16x32xf32>
    %47 = vector.shape_cast %44 : vector<16x32xf32> to vector<1x16x32xf32>
    tpu.vector_store %arg8[%c0_20, %c0_21, %c0_22], %47 {strides = array<i32>} : memref<1x16x32xf32, #tpu.memory_space<vmem>>, vector<1x16x32xf32>,
    return
  }
  func.func @transform_0(%arg0: i32) -> (i32, i32) {
    %c0_i32 = arith.constant 0 : i32
    %c0_i32_0 = arith.constant 0 : i32
    %c0_i32_1 = arith.constant 0 : i32
    return %c0_i32, %c0_i32_0 : i32, i32
  }
  func.func @transform_1(%arg0: i32) -> (i32, i32, i32) {
    %c0_i32 = arith.constant 0 : i32
    %c0_i32_0 = arith.constant 0 : i32
    %c0_i32_1 = arith.constant 0 : i32
    return %arg0, %c0_i32, %c0_i32_0 : i32, i32, i32
  }
  func.func @transform_2(%arg0: i32) -> (i32, i32, i32) {
    %c0_i32 = arith.constant 0 : i32
    %c0_i32_0 = arith.constant 0 : i32
    %c0_i32_1 = arith.constant 0 : i32
    return %arg0, %c0_i32, %c0_i32_0 : i32, i32, i32
  }
  func.func @transform_3(%arg0: i32) -> (i32, i32) {
    %c0_i32 = arith.constant 0 : i32
    %c0_i32_0 = arith.constant 0 : i32
    %c0_i32_1 = arith.constant 0 : i32
    return %c0_i32, %c0_i32_0 : i32, i32
  }
  func.func @transform_4(%arg0: i32) -> (i32, i32) {
    %c0_i32 = arith.constant 0 : i32
    %c0_i32_0 = arith.constant 0 : i32
    %c0_i32_1 = arith.constant 0 : i32
    return %c0_i32, %c0_i32_0 : i32, i32
  }
  func.func @transform_5(%arg0: i32) -> (i32, i32) {
    %c0_i32 = arith.constant 0 : i32
    %c0_i32_0 = arith.constant 0 : i32
    %c0_i32_1 = arith.constant 0 : i32
    return %c0_i32, %c0_i32_0 : i32, i32
  }
  func.func @transform_6(%arg0: i32) -> (i32, i32) {
    %c0_i32 = arith.constant 0 : i32
    %c0_i32_0 = arith.constant 0 : i32
    %c0_i32_1 = arith.constant 0 : i32
    return %c0_i32, %c0_i32_0 : i32, i32
  }
  func.func @transform_7(%arg0: i32) -> (i32, i32, i32) {
    %c0_i32 = arith.constant 0 : i32
    %c0_i32_0 = arith.constant 0 : i32
    %c0_i32_1 = arith.constant 0 : i32
    return %arg0, %c0_i32, %c0_i32_0 : i32, i32, i32
  }
}

</mosaic_0001>

<llo_original>
// kernel: dcgru_cell.1
$region0: #{dcgru_cell.1}
  #allocation0 [shape = 'u32[]', space=smem, size = 0x4, offset = 0x4, fixed_abs, tag = 'smem constant byte address 0x4 - core index']
  #allocation1 [shape = 'u32[144,128]{1,0:T(1,128)}', space=vmem, size = 0x12000, scoped, tag = 'internal scratch']
  %s0 = inlined_call_operand.vmem [shape: bf16[48,16], index: 0, kind: input, shape index: {}]
  %s1 = inlined_call_operand.vmem [shape: bf16[2,16,36], index: 1, kind: input, shape index: {}]
  %s2 = inlined_call_operand.vmem [shape: f32[2,16,32], index: 2, kind: input, shape index: {}]
  %s3 = inlined_call_operand.vmem [shape: bf16[108,64], index: 3, kind: input, shape index: {}]
  %s4 = inlined_call_operand.vmem [shape: bf16[108,32], index: 4, kind: input, shape index: {}]
  %s5 = inlined_call_operand.vmem [shape: f32[1,64], index: 5, kind: input, shape index: {}]
  %s6 = inlined_call_operand.vmem [shape: f32[1,32], index: 6, kind: input, shape index: {}]
  %s7 = inlined_call_operand.hbm [shape: f32[2,16,32], index: 7, kind: output, shape index: {}]
  %s8 = sld [smem:[#allocation0]]
  $region61: #{dcgru_cell.1} parent=0
    _
  %s10 = ssub.s32 1, %s8
  %s11 = scalar_select 0, %s10, %s8
  $region1: #{dcgru_cell.1} parent=0
    #allocation2 [shape = 'u8[16384]{0}', space=vmem, size = 0x4000, scoped, tag = 'output window, operand 0']
    #allocation3 [shape = 's32[2]{0}', space=sflag, size = 0x8, scoped, tag = 'scoped memory for dcgru_cell.1']
    %12 = vsyncpa [#allocation3], 0
    %s13 = scalar_lea.sflag [#allocation3], 1
    %14 = vsyncpa %s13, 0
    loop: start=0, step=1, limit=4
    $region2: #{dcgru_cell.1} parent=1 // loop_pre_header
      _
    $region3: #{dcgru_cell.1} parent=1 // loop_header
      %s16 = sphi 0, %s20
      %p17 = scmp.ge.s32.totalorder %s16, 4
      %s24 = sphi 0, %s24
      %s26 = sphi 0, %s24
      %s27 = sphi 0, %s26
      %s41 = sphi 0, %s27
      %s47 = sphi 0, %s49
      %s50 = sphi 0, %s47
      %s51 = sphi 0, %s50
      %s67 = sphi 0, %s51
      %s73 = sphi 0, %s75
      %s76 = sphi 0, %s73
      %s77 = sphi 0, %s76
      %s93 = sphi 0, %s77
      %s97 = sphi 0, %s97
      %s99 = sphi 0, %s97
      %s100 = sphi 0, %s99
      %s114 = sphi 0, %s100
      %s118 = sphi 0, %s118
      %s120 = sphi 0, %s118
      %s121 = sphi 0, %s120
      %s135 = sphi 0, %s121
      %s139 = sphi 0, %s139
      %s141 = sphi 0, %s139
      %s142 = sphi 0, %s141
      %s156 = sphi 0, %s142
      %s160 = sphi 0, %s160
      %s162 = sphi 0, %s160
      %s163 = sphi 0, %s162
      %s177 = sphi 0, %s163
      %s183 = sphi 0, %s185
      %s186 = sphi 0, %s183
      %s187 = sphi 0, %s186
      %s203 = sphi 0, %s187
    $region4: #{dcgru_cell.1} parent=1 // loop_header_branch
      %19 = sbr.rel (%p17) target = $region8
    $region5: #{dcgru_cell.1} parent=1 // loop_body
      %s21 = ssub.s32 %s16, 1
      %s22 = ssub.s32 %s16, 2
      %s23 = sadd.s32 %s16, 1
      %s25 = sadd.s32 %s24, 1
      %p28 = scmp.eq.s32.totalorder %s16, 1
      %p29 = scmp.ne.s32.totalorder %s24, %s26
      %p30 = scmp.eq.s32.totalorder %s16, 0
      %p31 = por %p29, %p30
      %p32 = scmp.ne.s32.totalorder %s24, %s26
      %p33 = scmp.eq.s32.totalorder %s21, 1
      %p34 = por %p32, %p33
      %p35 = scmp.ne.s32.totalorder %s26, %s27
      %p36 = scmp.eq.s32.totalorder %s21, 0
      %p37 = por %p35, %p36
      %p38 = scmp.ne.s32.totalorder %s26, %s27
      %p39 = scmp.eq.s32.totalorder %s22, 1
      %p40 = por %p38, %p39
      %p42 = scmp.ne.s32.totalorder %s27, %s41
      %p43 = scmp.eq.s32.totalorder %s22, 0
      %p44 = por %p42, %p43
      %s45 = ssub.s32 %s16, %s23
      %p46 = scmp.eq.s32.totalorder %s45, 0
      %s48 = sadd.s32 %s47, 1
      %s49 = scalar_select %p46, %s47, %s48
      %p52 = pneg %p46
      %p53 = scmp.eq.s32.totalorder %s16, 1
      %p54 = por %p52, %p53
      %p55 = scmp.ne.s32.totalorder %s47, %s50
      %p56 = scmp.eq.s32.totalorder %s16, 0
      %p57 = por %p55, %p56
      %p58 = scmp.ne.s32.totalorder %s47, %s50
      %p59 = scmp.eq.s32.totalorder %s21, 1
      %p60 = por %p58, %p59
      %p61 = scmp.ne.s32.totalorder %s50, %s51
      %p62 = scmp.eq.s32.totalorder %s21, 0
      %p63 = por %p61, %p62
      %p64 = scmp.ne.s32.totalorder %s50, %s51
      %p65 = scmp.eq.s32.totalorder %s22, 1
      %p66 = por %p64, %p65
      %p68 = scmp.ne.s32.totalorder %s51, %s67
      %p69 = scmp.eq.s32.totalorder %s22, 0
      %p70 = por %p68, %p69
      %s71 = ssub.s32 %s16, %s23
      %p72 = scmp.eq.s32.totalorder %s71, 0
      %s74 = sadd.s32 %s73, 1
      %s75 = scalar_select %p72, %s73, %s74
      %p78 = pneg %p72
      %p79 = scmp.eq.s32.totalorder %s16, 1
      %p80 = por %p78, %p79
      %p81 = scmp.ne.s32.totalorder %s73, %s76
      %p82 = scmp.eq.s32.totalorder %s16, 0
      %p83 = por %p81, %p82
      %p84 = scmp.ne.s32.totalorder %s73, %s76
      %p85 = scmp.eq.s32.totalorder %s21, 1
      %p86 = por %p84, %p85
      %p87 = scmp.ne.s32.totalorder %s76, %s77
      %p88 = scmp.eq.s32.totalorder %s21, 0
      %p89 = por %p87, %p88
      %p90 = scmp.ne.s32.totalorder %s76, %s77
      %p91 = scmp.eq.s32.totalorder %s22, 1
      %p92 = por %p90, %p91
      %p94 = scmp.ne.s32.totalorder %s77, %s93
      %p95 = scmp.eq.s32.totalorder %s22, 0
      %p96 = por %p94, %p95
      %s98 = sadd.s32 %s97, 1
      %p101 = scmp.eq.s32.totalorder %s16, 1
      %p102 = scmp.ne.s32.totalorder %s97, %s99
      %p103 = scmp.eq.s32.totalorder %s16, 0
      %p104 = por %p102, %p103
      %p105 = scmp.ne.s32.totalorder %s97, %s99
      %p106 = scmp.eq.s32.totalorder %s21, 1
      %p107 = por %p105, %p106
      %p108 = scmp.ne.s32.totalorder %s99, %s100
      %p109 = scmp.eq.s32.totalorder %s21, 0
      %p110 = por %p108, %p109
      %p111 = scmp.ne.s32.totalorder %s99, %s100
      %p112 = scmp.eq.s32.totalorder %s22, 1
      %p113 = por %p111, %p112
      %p115 = scmp.ne.s32.totalorder %s100, %s114
      %p116 = scmp.eq.s32.totalorder %s22, 0
      %p117 = por %p115, %p116
      %s119 = sadd.s32 %s118, 1
      %p122 = scmp.eq.s32.totalorder %s16, 1
      %p123 = scmp.ne.s32.totalorder %s118, %s120
      %p124 = scmp.eq.s32.totalorder %s16, 0
      %p125 = por %p123, %p124
      %p126 = scmp.ne.s32.totalorder %s118, %s120
      %p127 = scmp.eq.s32.totalorder %s21, 1
      %p128 = por %p126, %p127
      %p129 = scmp.ne.s32.totalorder %s120, %s121
      %p130 = scmp.eq.s32.totalorder %s21, 0
      %p131 = por %p129, %p130
      %p132 = scmp.ne.s32.totalorder %s120, %s121
      %p133 = scmp.eq.s32.totalorder %s22, 1
      %p134 = por %p132, %p133
      %p136 = scmp.ne.s32.totalorder %s121, %s135
      %p137 = scmp.eq.s32.totalorder %s22, 0
      %p138 = por %p136, %p137
      %s140 = sadd.s32 %s139, 1
      %p143 = scmp.eq.s32.totalorder %s16, 1
      %p144 = scmp.ne.s32.totalorder %s139, %s141
      %p145 = scmp.eq.s32.totalorder %s16, 0
      %p146 = por %p144, %p145
      %p147 = scmp.ne.s32.totalorder %s139, %s141
      %p148 = scmp.eq.s32.totalorder %s21, 1
      %p149 = por %p147, %p148
      %p150 = scmp.ne.s32.totalorder %s141, %s142
      %p151 = scmp.eq.s32.totalorder %s21, 0
      %p152 = por %p150, %p151
      %p153 = scmp.ne.s32.totalorder %s141, %s142
      %p154 = scmp.eq.s32.totalorder %s22, 1
      %p155 = por %p153, %p154
      %p157 = scmp.ne.s32.totalorder %s142, %s156
      %p158 = scmp.eq.s32.totalorder %s22, 0
      %p159 = por %p157, %p158
      %s161 = sadd.s32 %s160, 1
      %p164 = scmp.eq.s32.totalorder %s16, 1
      %p165 = scmp.ne.s32.totalorder %s160, %s162
      %p166 = scmp.eq.s32.totalorder %s16, 0
      %p167 = por %p165, %p166
      %p168 = scmp.ne.s32.totalorder %s160, %s162
      %p169 = scmp.eq.s32.totalorder %s21, 1
      %p170 = por %p168, %p169
      %p171 = scmp.ne.s32.totalorder %s162, %s163
      %p172 = scmp.eq.s32.totalorder %s21, 0
      %p173 = por %p171, %p172
      %p174 = scmp.ne.s32.totalorder %s162, %s163
      %p175 = scmp.eq.s32.totalorder %s22, 1
      %p176 = por %p174, %p175
      %p178 = scmp.ne.s32.totalorder %s163, %s177
      %p179 = scmp.eq.s32.totalorder %s22, 0
      %p180 = por %p178, %p179
      %s181 = ssub.s32 %s16, %s23
      %p182 = scmp.eq.s32.totalorder %s181, 0
      %s184 = sadd.s32 %s183, 1
      %s185 = scalar_select %p182, %s183, %s184
      %p188 = pneg %p182
      %p189 = scmp.eq.s32.totalorder %s16, 1
      %p190 = por %p188, %p189
      %p191 = scmp.ne.s32.totalorder %s183, %s186
      %p192 = scmp.eq.s32.totalorder %s16, 0
      %p193 = por %p191, %p192
      %p194 = scmp.ne.s32.totalorder %s183, %s186
      %p195 = scmp.eq.s32.totalorder %s21, 1
      %p196 = por %p194, %p195
      %p197 = scmp.ne.s32.totalorder %s186, %s187
      %p198 = scmp.eq.s32.totalorder %s21, 0
      %p199 = por %p197, %p198
      %p200 = scmp.ne.s32.totalorder %s186, %s187
      %p201 = scmp.eq.s32.totalorder %s22, 1
      %p202 = por %p200, %p201
      %p204 = scmp.ne.s32.totalorder %s187, %s203
      %p205 = scmp.eq.s32.totalorder %s22, 0
      %p206 = por %p204, %p205
      %p207 = scmp.le.s32.totalorder 1, %s16
      %p208 = scmp.lt.s32.totalorder %s16, 3
      %p209 = pnand %p207, %p208
      %p210 = pneg %p209
      // Predicated region
      $region9: #{dcgru_cell.1} parent=5 // pred_check
        _
      $region10: #{dcgru_cell.1} parent=5 // pred_check_branch
        %212 = sbr.rel (%p209) target = $region12
      $region11: #{dcgru_cell.1} parent=5 // pred_region
        %s213 = ssub.s32 %s16, 1
        // Predicated region
        $region13: #{dcgru_cell.1} parent=11 // pred_check
          %p214 = pneg %p37
        $region14: #{dcgru_cell.1} parent=11 // pred_check_branch
          %216 = sbr.rel (%p214) target = $region16
        $region15: #{dcgru_cell.1} parent=11 // pred_region
          _
        $region16: #{dcgru_cell.1} parent=11 // pred_fallthru
          _
        // Predicated region
        $region17: #{dcgru_cell.1} parent=11 // pred_check
          %p217 = pneg %p110
        $region18: #{dcgru_cell.1} parent=11 // pred_check_branch
          %219 = sbr.rel (%p217) target = $region20
        $region19: #{dcgru_cell.1} parent=11 // pred_region
          _
        $region20: #{dcgru_cell.1} parent=11 // pred_fallthru
          _
        // Predicated region
        $region21: #{dcgru_cell.1} parent=11 // pred_check
          %p220 = pneg %p131
        $region22: #{dcgru_cell.1} parent=11 // pred_check_branch
          %222 = sbr.rel (%p220) target = $region24
        $region23: #{dcgru_cell.1} parent=11 // pred_region
          _
        $region24: #{dcgru_cell.1} parent=11 // pred_fallthru
          _
        // Predicated region
        $region25: #{dcgru_cell.1} parent=11 // pred_check
          %p223 = pneg %p152
        $region26: #{dcgru_cell.1} parent=11 // pred_check_branch
          %225 = sbr.rel (%p223) target = $region28
        $region27: #{dcgru_cell.1} parent=11 // pred_region
          _
        $region28: #{dcgru_cell.1} parent=11 // pred_fallthru
          _
        // Predicated region
        $region29: #{dcgru_cell.1} parent=11 // pred_check
          %p226 = pneg %p173
        $region30: #{dcgru_cell.1} parent=11 // pred_check_branch
          %228 = sbr.rel (%p226) target = $region32
        $region31: #{dcgru_cell.1} parent=11 // pred_region
          _
        $region32: #{dcgru_cell.1} parent=11 // pred_fallthru
          _
      $region12: #{dcgru_cell.1} parent=5 // pred_fallthru
        _
      %p229 = scmp.lt.s32.totalorder %s16, 2
      // Predicated region
      $region33: #{dcgru_cell.1} parent=5 // pred_check
        %p230 = pneg %p229
      $region34: #{dcgru_cell.1} parent=5 // pred_check_branch
        %232 = sbr.rel (%p230) target = $region36
      $region35: #{dcgru_cell.1} parent=5 // pred_region
        // Predicated region
        $region37: #{dcgru_cell.1} parent=35 // pred_check
          %p233 = pneg %p57
        $region38: #{dcgru_cell.1} parent=35 // pred_check_branch
          %235 = sbr.rel (%p233) target = $region40
        $region39: #{dcgru_cell.1} parent=35 // pred_region
          %p236 = scmp.lt.s32.totalorder %s16, 1
          %s237 = scalar_select %p236, %s16, 1
          %s238 = smul.addr %s237, 2
          %s239 = smul.addr %s238, 4
          %s240 = scalar_lea.vmem %s1, %s239
        $region40: #{dcgru_cell.1} parent=35 // pred_fallthru
          _
        // Predicated region
        $region41: #{dcgru_cell.1} parent=35 // pred_check
          %p241 = pneg %p83
        $region42: #{dcgru_cell.1} parent=35 // pred_check_branch
          %243 = sbr.rel (%p241) target = $region44
        $region43: #{dcgru_cell.1} parent=35 // pred_region
          %p244 = scmp.lt.s32.totalorder %s16, 1
          %s245 = scalar_select %p244, %s16, 1
          %s246 = smul.addr %s245, 2
          %s247 = smul.addr %s246, 8
          %s248 = scalar_lea.vmem %s2, %s247
        $region44: #{dcgru_cell.1} parent=35 // pred_fallthru
          _
      $region36: #{dcgru_cell.1} parent=5 // pred_fallthru
        _
      %p249 = scmp.le.s32.totalorder 1, %s16
      %p250 = scmp.lt.s32.totalorder %s16, 3
      %p251 = pnand %p249, %p250
      %p252 = pneg %p251
      // Predicated region
      $region45: #{dcgru_cell.1} parent=5 // pred_check
        _
      $region46: #{dcgru_cell.1} parent=5 // pred_check_branch
        %254 = sbr.rel (%p251) target = $region48
      $region47: #{dcgru_cell.1} parent=5 // pred_region
        %s255 = ssub.s32 %s16, 1
        %p256 = pneg %p37
        %p257 = pneg %p34
        %p258 = scmp.lt.s32.totalorder %s21, 1
        %s259 = scalar_select %p258, %s21, 1
        %s260 = smul.addr %s259, 2
        %s261 = smul.addr %s260, 4
        %s262 = scalar_lea.vmem %s1, %s261
        %p263 = pneg %p63
        %p264 = pneg %p60
        %p265 = scmp.lt.s32.totalorder %s21, 1
        %s266 = scalar_select %p265, %s21, 1
        %s267 = smul.addr %s266, 2
        %s268 = smul.addr %s267, 8
        %s269 = scalar_lea.vmem %s2, %s268
        %p270 = pneg %p89
        %p271 = pneg %p86
        %p272 = pneg %p110
        %p273 = pneg %p107
        %p274 = pneg %p131
        %p275 = pneg %p128
        %p276 = pneg %p152
        %p277 = pneg %p149
        %p278 = pneg %p173
        %p279 = pneg %p170
        %p280 = pneg %p199
        %p281 = pneg %p196
        %s282 = sand.u32 %s186, 1
        %s283 = scalar_lea.sflag [#allocation3], %s282
        %s284 = sand.u32 %s186, 1
        %s285 = smul.addr %s284, 16
        %s286 = scalar_lea.vmem [#allocation2], %s285
        %p287 = scmp.lt.s32.totalorder %s21, 1
        %s288 = scalar_select %p287, %s21, 1
        %s289 = smul.addr %s288, 2
        %s290 = smul.addr %s289, 4
        %s291 = scalar_lea.vmem %s1, %s290
        %p292 = scmp.lt.s32.totalorder %s21, 1
        %s293 = scalar_select %p292, %s21, 1
        %s294 = smul.addr %s293, 2
        %s295 = smul.addr %s294, 8
        %s296 = scalar_lea.vmem %s2, %s295
        %v298 = vld [vmem:[%s0] sm:$0xf]
        %v299 = vld [vmem:[%s0 + $0x4] sm:$0xf]
        %v300 = vld [vmem:[%s0 + $0x8] sm:$0xf]
        %v301 = vld [vmem:[%s0 + $0xc] sm:$0xf]
        %v302 = vld [vmem:[%s0 + $0x10] sm:$0xf]
        %v303 = vld [vmem:[%s0 + $0x14] sm:$0xf]
        %v304 = vld [vmem:[%s291] sm:$0xf]
        %v305 = vld [vmem:[%s291 + $0x4] sm:$0xf]
        %v306 = vld [vmem:[%s296] sm:$0xff]
        %v307 = vld [vmem:[%s296 + $0x8] sm:$0xff]
        %v314 = vunpack.c.l.b16 %v298
        %v315 = vunpack.c.l.b16 %v299
        %v316 = vunpack.c.l.b16 %v300
        %v317 = vunpack.c.l.b16 %v301
        %v318 = vunpack.c.l.b16 %v302
        %v319 = vunpack.c.l.b16 %v303
        %v320 = vpack.c.b16 %v315, %v314
        %v321 = vpack.c.b16 %v317, %v316
        %v322 = vpack.c.b16 %v319, %v318
        %v325 = vunpack.c.l.b16 %v304
        %v326 = vunpack.c.l.b16 %v305
        %v327 = vpack.c.b16 %v326, %v325
        %vm329 = vcmask 130048
        %v331 = vsel %vm329, %v320, 0
        %v334 = vsel %vm329, %v321, 0
        %v337 = vsel %vm329, %v322, 0
        %339 = vmatprep.subr.bf16.mxu0 0
        %340 = vmatpush1.bf16.msra.mxu0 %v327
        %341 = vmatprep.subr.bf16.mxu0 0
        %342 = vmatpush1.bf16.msra.mxu0 0
        %343 = vmatprep.subr.bf16.mxu0 0
        %344 = vmatpush1.bf16.msra.mxu0 0
        %345 = vmatprep.subr.bf16.mxu0 0
        %346 = vmatpush1.bf16.msra.mxu0 0
        %347 = vmatprep.subr.bf16.mxu0 0
        %348 = vmatpush1.bf16.msra.mxu0 0
        %349 = vmatprep.subr.bf16.mxu0 0
        %350 = vmatpush1.bf16.msra.mxu0 0
        %351 = vmatprep.subr.bf16.mxu0 0
        %352 = vmatpush1.bf16.msra.mxu0 0
        %353 = vmatprep.subr.bf16.mxu0 0
        %354 = vmatpush1.bf16.msra.mxu0 0
        %355 = vmatprep.subr.bf16.mxu0 0
        %356 = vmatpush1.bf16.msra.mxu0 0
        %357 = vmatprep.subr.bf16.mxu0 0
        %358 = vmatpush1.bf16.msra.mxu0 0
        %359 = vmatprep.subr.bf16.mxu0 0
        %360 = vmatpush1.bf16.msra.mxu0 0
        %361 = vmatprep.subr.bf16.mxu0 0
        %362 = vmatpush1.bf16.msra.mxu0 0
        %363 = vmatprep.subr.bf16.mxu0 0
        %364 = vmatpush1.bf16.msra.mxu0 0
        %365 = vmatprep.subr.bf16.mxu0 0
        %366 = vmatpush1.bf16.msra.mxu0 0
        %367 = vmatprep.subr.bf16.mxu0 0
        %368 = vmatpush1.bf16.msra.mxu0 0
        %369 = vmatprep.subr.bf16.mxu0 0
        %370 = vmatpush1.bf16.msra.mxu0 0
        %371 = vmatprep.mubr.bf16.mxu0 0
        %372 = vmatmul.mubr.bf16.gmra.mrb[0].mxu0 %v331
        %v373 = vpop.f32.mrb[0].mxu0
        %v374 = vadd.f32 0.0, %v373
        %v375 = vpop.f32.mrb[0].mxu0
        %v376 = vpop.f32.mrb[0].mxu0
        %v377 = vadd.f32 0.0, %v376
        %v378 = vpop.f32.mrb[0].mxu0
        %379 = vmatprep.mubr.bf16.mxu0 0
        %380 = vmatmul.mubr.bf16.gmra.mrb[0].mxu0 %v334
        %v381 = vpop.f32.mrb[0].mxu0
        %v382 = vadd.f32 0.0, %v381
        %v383 = vpop.f32.mrb[0].mxu0
        %v384 = vpop.f32.mrb[0].mxu0
        %v385 = vadd.f32 0.0, %v384
        %v386 = vpop.f32.mrb[0].mxu0
        %387 = vmatprep.mubr.bf16.mxu0 0
        %388 = vmatmul.mubr.bf16.gmra.mrb[0].mxu0 %v337
        %v389 = vpop.f32.mrb[0].mxu0
        %v390 = vadd.f32 0.0, %v389
        %v391 = vpop.f32.mrb[0].mxu0
        %v392 = vpop.f32.mrb[0].mxu0
        %v393 = vadd.f32 0.0, %v392
        %v394 = vpop.f32.mrb[0].mxu0
        %395 = vdwg.mxu0
        %v396 = vpack.c.bf16 %v377, %v374
        %v397 = vpack.c.bf16 %v385, %v382
        %v398 = vpack.c.bf16 %v393, %v390
        %400 = vrot.lane.b32.xlu0 %v397, 36
        %v401 = vpop.permute.xlu0 %400
        %403 = vrot.lane.b32.xlu0 %v398, 72
        %v404 = vpop.permute.xlu0 %403
        %vm405 = vcmask 293888
        %v408 = vsel %vm405, %v396, %v401
        %vm409 = vcmask 588800
        %v411 = vsel %vm409, %v408, %v404
        %v412 = vld [vmem:[%s3] sm:$0xf]
        %v413 = vld [vmem:[%s3 + $0x4] sm:$0xf]
        %v414 = vld [vmem:[%s3 + $0x8] sm:$0xf]
        %v415 = vld [vmem:[%s3 + $0xc] sm:$0xf]
        %v416 = vld [vmem:[%s3 + $0x10] sm:$0xf]
        %v417 = vld [vmem:[%s3 + $0x14] sm:$0xf]
        %v418 = vld [vmem:[%s3 + $0x18] sm:$0xf]
        %v419 = vld [vmem:[%s3 + $0x1c] sm:$0xf]
        %v420 = vld [vmem:[%s3 + $0x20] sm:$0xf]
        %v421 = vld [vmem:[%s3 + $0x24] sm:$0xf]
        %v422 = vld [vmem:[%s3 + $0x28] sm:$0xf]
        %v423 = vld [vmem:[%s3 + $0x2c] sm:$0xf]
        %v424 = vld [vmem:[%s3 + $0x30] sm:$0xf]
        %v425 = vld [vmem:[%s3 + $0x34] sm:$0x3]
        %v426 = vld [vmem:[%s5] sm:$0x1]
        %v428 = vlaneseq
        %v429 = vshrl.u32 %v428, 7
        %v430 = vsub.s32 0, %v429
        %v431 = vrot.slane %v426, %v430
        %v447 = vunpack.c.l.b16 %v412
        %v448 = vunpack.c.l.b16 %v413
        %v449 = vunpack.c.l.b16 %v414
        %v450 = vunpack.c.l.b16 %v415
        %v451 = vunpack.c.l.b16 %v416
        %v452 = vunpack.c.l.b16 %v417
        %v453 = vunpack.c.l.b16 %v418
        %v454 = vunpack.c.l.b16 %v419
        %v455 = vunpack.c.l.b16 %v420
        %v456 = vunpack.c.l.b16 %v421
        %v457 = vunpack.c.l.b16 %v422
        %v458 = vunpack.c.l.b16 %v423
        %v459 = vunpack.c.l.b16 %v424
        %v460 = vunpack.c.l.b16 %v425
        %v461 = vpack.c.b16 %v448, %v447
        %v462 = vpack.c.b16 %v450, %v449
        %v463 = vpack.c.b16 %v452, %v451
        %v464 = vpack.c.b16 %v454, %v453
        %v465 = vpack.c.b16 %v456, %v455
        %v466 = vpack.c.b16 %v458, %v457
        %v467 = vpack.c.b16 %v460, %v459
        %vm474 = vcmask 883712
        %v475 = vsel %vm474, %v411, 0
        %vm477 = vcmask 1045504
        %v479 = vsel %vm477, %v467, 0
        %481 = vmatprep.subr.bf16.mxu0 0
        %482 = vmatpush1.bf16.msra.mxu0 %v461
        %483 = vmatprep.subr.bf16.mxu0 0
        %484 = vmatpush1.bf16.msra.mxu0 %v462
        %485 = vmatprep.subr.bf16.mxu0 0
        %486 = vmatpush1.bf16.msra.mxu0 %v463
        %487 = vmatprep.subr.bf16.mxu0 0
        %488 = vmatpush1.bf16.msra.mxu0 %v464
        %489 = vmatprep.subr.bf16.mxu0 0
        %490 = vmatpush1.bf16.msra.mxu0 %v465
        %491 = vmatprep.subr.bf16.mxu0 0
        %492 = vmatpush1.bf16.msra.mxu0 %v466
        %493 = vmatprep.subr.bf16.mxu0 0
        %494 = vmatpush1.bf16.msra.mxu0 %v479
        %495 = vmatprep.subr.bf16.mxu0 0
        %496 = vmatpush1.bf16.msra.mxu0 0
        %497 = vmatprep.subr.bf16.mxu0 0
        %498 = vmatpush1.bf16.msra.mxu0 0
        %499 = vmatprep.subr.bf16.mxu0 0
        %500 = vmatpush1.bf16.msra.mxu0 0
        %501 = vmatprep.subr.bf16.mxu0 0
        %502 = vmatpush1.bf16.msra.mxu0 0
        %503 = vmatprep.subr.bf16.mxu0 0
        %504 = vmatpush1.bf16.msra.mxu0 0
        %505 = vmatprep.subr.bf16.mxu0 0
        %506 = vmatpush1.bf16.msra.mxu0 0
        %507 = vmatprep.subr.bf16.mxu0 0
        %508 = vmatpush1.bf16.msra.mxu0 0
        %509 = vmatprep.subr.bf16.mxu0 0
        %510 = vmatpush1.bf16.msra.mxu0 0
        %511 = vmatprep.subr.bf16.mxu0 0
        %512 = vmatpush1.bf16.msra.mxu0 0
        %513 = vmatprep.mubr.bf16.mxu0 0
        %514 = vmatmul.mubr.bf16.gmra.mrb[0].mxu0 %v475
        %v515 = vpop.f32.mrb[0].mxu0
        %v516 = vadd.f32 %v431, %v515
        %v517 = vpop.f32.mrb[0].mxu0
        %v518 = vpop.f32.mrb[0].mxu0
        %v519 = vadd.f32 %v431, %v518
        %v520 = vpop.f32.mrb[0].mxu0
        %521 = vdwg.mxu0
        %v522 = vxor.u32 %v516, 2147483648
        %v523 = vxor.u32 %v519, 2147483648
        %v524 = vmul.f32 %v522, 1.442695
        %v525 = vpow.pop %v524
        %v526 = vmul.f32 %v523, 1.442695
        %v527 = vpow.pop %v526
        %v528 = vadd.f32 %v525, 1.0
        %v529 = vadd.f32 %v527, 1.0
        %v530 = vrcp.pop %v528
        %v531 = vmul.f32 1.0, %v530
        %v532 = vrcp.pop %v529
        %v533 = vmul.f32 1.0, %v532
        %536 = vrot.lane.b32.xlu0 %v306, 32
        %v537 = vpop.permute.xlu0 %536
        %538 = vrot.lane.b32.xlu0 %v307, 32
        %v539 = vpop.permute.xlu0 %538
        %v542 = vmul.f32 %v531, %v537
        %v543 = vmul.f32 %v533, %v539
        %v544 = vpack.c.bf16 %v543, %v542
        %546 = vrot.lane.b32.xlu0 %v544, 96
        %v547 = vpop.permute.xlu0 %546
        %549 = vmatprep.subr.bf16.mxu0 0
        %550 = vmatpush1.bf16.msra.mxu0 %v547
        %551 = vmatprep.subr.bf16.mxu0 0
        %552 = vmatpush1.bf16.msra.mxu0 0
        %553 = vmatprep.subr.bf16.mxu0 0
        %554 = vmatpush1.bf16.msra.mxu0 0
        %555 = vmatprep.subr.bf16.mxu0 0
        %556 = vmatpush1.bf16.msra.mxu0 0
        %557 = vmatprep.subr.bf16.mxu0 0
        %558 = vmatpush1.bf16.msra.mxu0 0
        %559 = vmatprep.subr.bf16.mxu0 0
        %560 = vmatpush1.bf16.msra.mxu0 0
        %561 = vmatprep.subr.bf16.mxu0 0
        %562 = vmatpush1.bf16.msra.mxu0 0
        %563 = vmatprep.subr.bf16.mxu0 0
        %564 = vmatpush1.bf16.msra.mxu0 0
        %565 = vmatprep.subr.bf16.mxu0 0
        %566 = vmatpush1.bf16.msra.mxu0 0
        %567 = vmatprep.subr.bf16.mxu0 0
        %568 = vmatpush1.bf16.msra.mxu0 0
        %569 = vmatprep.subr.bf16.mxu0 0
        %570 = vmatpush1.bf16.msra.mxu0 0
        %571 = vmatprep.subr.bf16.mxu0 0
        %572 = vmatpush1.bf16.msra.mxu0 0
        %573 = vmatprep.subr.bf16.mxu0 0
        %574 = vmatpush1.bf16.msra.mxu0 0
        %575 = vmatprep.subr.bf16.mxu0 0
        %576 = vmatpush1.bf16.msra.mxu0 0
        %577 = vmatprep.subr.bf16.mxu0 0
        %578 = vmatpush1.bf16.msra.mxu0 0
        %579 = vmatprep.subr.bf16.mxu0 0
        %580 = vmatpush1.bf16.msra.mxu0 0
        %581 = vmatprep.mubr.bf16.mxu0 0
        %582 = vmatmul.mubr.bf16.gmra.mrb[0].mxu0 %v331
        %v583 = vpop.f32.mrb[0].mxu0
        %v584 = vadd.f32 0.0, %v583
        %v585 = vpop.f32.mrb[0].mxu0
        %v586 = vpop.f32.mrb[0].mxu0
        %v587 = vadd.f32 0.0, %v586
        %v588 = vpop.f32.mrb[0].mxu0
        %589 = vmatprep.mubr.bf16.mxu0 0
        %590 = vmatmul.mubr.bf16.gmra.mrb[0].mxu0 %v334
        %v591 = vpop.f32.mrb[0].mxu0
        %v592 = vadd.f32 0.0, %v591
        %v593 = vpop.f32.mrb[0].mxu0
        %v594 = vpop.f32.mrb[0].mxu0
        %v595 = vadd.f32 0.0, %v594
        %v596 = vpop.f32.mrb[0].mxu0
        %597 = vmatprep.mubr.bf16.mxu0 0
        %598 = vmatmul.mubr.bf16.gmra.mrb[0].mxu0 %v337
        %v599 = vpop.f32.mrb[0].mxu0
        %v600 = vadd.f32 0.0, %v599
        %v601 = vpop.f32.mrb[0].mxu0
        %v602 = vpop.f32.mrb[0].mxu0
        %v603 = vadd.f32 0.0, %v602
        %v604 = vpop.f32.mrb[0].mxu0
        %605 = vdwg.mxu0
        %v606 = vpack.c.bf16 %v587, %v584
        %v607 = vpack.c.bf16 %v595, %v592
        %v608 = vpack.c.bf16 %v603, %v600
        %610 = vrot.lane.b32.xlu0 %v606, 4
        %v611 = vpop.permute.xlu0 %610
        %613 = vrot.lane.b32.xlu0 %v607, 40
        %v614 = vpop.permute.xlu0 %613
        %616 = vrot.lane.b32.xlu0 %v608, 76
        %v617 = vpop.permute.xlu0 %616
        %vm618 = vcmask 31744
        %v620 = vsel %vm618, %v396, %v611
        %v621 = vsel %vm405, %v620, %v401
        %vm622 = vcmask 326656
        %v624 = vsel %vm622, %v621, %v614
        %v625 = vsel %vm409, %v624, %v404
        %vm626 = vcmask 621568
        %v628 = vsel %vm626, %v625, %v617
        %v629 = vld [vmem:[%s4] sm:$0xf]
        %v630 = vld [vmem:[%s4 + $0x4] sm:$0xf]
        %v631 = vld [vmem:[%s4 + $0x8] sm:$0xf]
        %v632 = vld [vmem:[%s4 + $0xc] sm:$0xf]
        %v633 = vld [vmem:[%s4 + $0x10] sm:$0xf]
        %v634 = vld [vmem:[%s4 + $0x14] sm:$0xf]
        %v635 = vld [vmem:[%s4 + $0x18] sm:$0xf]
        %v636 = vld [vmem:[%s4 + $0x1c] sm:$0xf]
        %v637 = vld [vmem:[%s4 + $0x20] sm:$0xf]
        %v638 = vld [vmem:[%s4 + $0x24] sm:$0xf]
        %v639 = vld [vmem:[%s4 + $0x28] sm:$0xf]
        %v640 = vld [vmem:[%s4 + $0x2c] sm:$0xf]
        %v641 = vld [vmem:[%s4 + $0x30] sm:$0xf]
        %v642 = vld [vmem:[%s4 + $0x34] sm:$0x3]
        %v643 = vld [vmem:[%s6] sm:$0x1]
        %v645 = vlaneseq
        %v646 = vshrl.u32 %v645, 7
        %v647 = vsub.s32 0, %v646
        %v648 = vrot.slane %v643, %v647
        %v664 = vunpack.c.l.b16 %v629
        %v665 = vunpack.c.l.b16 %v630
        %v666 = vunpack.c.l.b16 %v631
        %v667 = vunpack.c.l.b16 %v632
        %v668 = vunpack.c.l.b16 %v633
        %v669 = vunpack.c.l.b16 %v634
        %v670 = vunpack.c.l.b16 %v635
        %v671 = vunpack.c.l.b16 %v636
        %v672 = vunpack.c.l.b16 %v637
        %v673 = vunpack.c.l.b16 %v638
        %v674 = vunpack.c.l.b16 %v639
        %v675 = vunpack.c.l.b16 %v640
        %v676 = vunpack.c.l.b16 %v641
        %v677 = vunpack.c.l.b16 %v642
        %v678 = vpack.c.b16 %v665, %v664
        %v679 = vpack.c.b16 %v667, %v666
        %v680 = vpack.c.b16 %v669, %v668
        %v681 = vpack.c.b16 %v671, %v670
        %v682 = vpack.c.b16 %v673, %v672
        %v683 = vpack.c.b16 %v675, %v674
        %v684 = vpack.c.b16 %v677, %v676
        %v691 = vsel %vm474, %v628, 0
        %v694 = vsel %vm477, %v684, 0
        %696 = vmatprep.subr.bf16.mxu0 0
        %697 = vmatpush1.bf16.msra.mxu0 %v678
        %698 = vmatprep.subr.bf16.mxu0 0
        %699 = vmatpush1.bf16.msra.mxu0 %v679
        %700 = vmatprep.subr.bf16.mxu0 0
        %701 = vmatpush1.bf16.msra.mxu0 %v680
        %702 = vmatprep.subr.bf16.mxu0 0
        %703 = vmatpush1.bf16.msra.mxu0 %v681
        %704 = vmatprep.subr.bf16.mxu0 0
        %705 = vmatpush1.bf16.msra.mxu0 %v682
        %706 = vmatprep.subr.bf16.mxu0 0
        %707 = vmatpush1.bf16.msra.mxu0 %v683
        %708 = vmatprep.subr.bf16.mxu0 0
        %709 = vmatpush1.bf16.msra.mxu0 %v694
        %710 = vmatprep.subr.bf16.mxu0 0
        %711 = vmatpush1.bf16.msra.mxu0 0
        %712 = vmatprep.subr.bf16.mxu0 0
        %713 = vmatpush1.bf16.msra.mxu0 0
        %714 = vmatprep.subr.bf16.mxu0 0
        %715 = vmatpush1.bf16.msra.mxu0 0
        %716 = vmatprep.subr.bf16.mxu0 0
        %717 = vmatpush1.bf16.msra.mxu0 0
        %718 = vmatprep.subr.bf16.mxu0 0
        %719 = vmatpush1.bf16.msra.mxu0 0
        %720 = vmatprep.subr.bf16.mxu0 0
        %721 = vmatpush1.bf16.msra.mxu0 0
        %722 = vmatprep.subr.bf16.mxu0 0
        %723 = vmatpush1.bf16.msra.mxu0 0
        %724 = vmatprep.subr.bf16.mxu0 0
        %725 = vmatpush1.bf16.msra.mxu0 0
        %726 = vmatprep.subr.bf16.mxu0 0
        %727 = vmatpush1.bf16.msra.mxu0 0
        %728 = vmatprep.mubr.bf16.mxu0 0
        %729 = vmatmul.mubr.bf16.gmra.mrb[0].mxu0 %v691
        %v730 = vpop.f32.mrb[0].mxu0
        %v731 = vadd.f32 %v648, %v730
        %v732 = vpop.f32.mrb[0].mxu0
        %v733 = vpop.f32.mrb[0].mxu0
        %v734 = vadd.f32 %v648, %v733
        %v735 = vpop.f32.mrb[0].mxu0
        %736 = vdwg.mxu0
        %v737 = vtanh.pop %v731
        %v738 = vtanh.pop %v734
        %v739 = vsub.f32 1.0, %v531
        %v740 = vsub.f32 1.0, %v533
        %v741 = vmul.f32 %v739, %v306
        %v742 = vmul.f32 %v740, %v307
        %v743 = vmul.f32 %v531, %v737
        %v744 = vmul.f32 %v533, %v738
        %v745 = vadd.f32 %v741, %v743
        %v746 = vadd.f32 %v742, %v744
        %vm747 = vcmask 261120
        %748 = vst.msk [vmem:[%s286] sm:$0xff] %vm747, %v745
        %749 = vst.msk [vmem:[%s286 + $0x8] sm:$0xff] %vm747, %v746
        %s750 = sand.u32 %s186, 1
        %s751 = scalar_lea.sflag [#allocation3], %s750
        %s752 = sand.u32 %s186, 1
        %s753 = smul.addr %s752, 16
        %s754 = scalar_lea.vmem [#allocation2], %s753
        // Predicated region
        $region49: #{dcgru_cell.1} parent=47 // pred_check
          %p755 = pneg %p196
        $region50: #{dcgru_cell.1} parent=47 // pred_check_branch
          %757 = sbr.rel (%p755) target = $region52
        $region51: #{dcgru_cell.1} parent=47 // pred_region
          %s759 = ssub.s32 256, 256
          %760 = vsyncadd %s751, %s759
          %s761 = smul.addr %s21, 2
          %s762 = smul.addr %s761, 128
          %s763 = scalar_lea.hbm %s7, %s762
          %s764 = sshll.u32 %s754, 4
          %s765 = int_to_ptr.vmem [resolvable:$true] %s764
          %770 = dma.vmem_to_hbm [thread:$0]  %s765, 256, %s763, %s751, 128, 128, 8
        $region52: #{dcgru_cell.1} parent=47 // pred_fallthru
          _
      $region48: #{dcgru_cell.1} parent=5 // pred_fallthru
        _
      %p771 = scmp.le.s32.totalorder 2, %s16
      // Predicated region
      $region53: #{dcgru_cell.1} parent=5 // pred_check
        %p772 = pneg %p771
      $region54: #{dcgru_cell.1} parent=5 // pred_check_branch
        %774 = sbr.rel (%p772) target = $region56
      $region55: #{dcgru_cell.1} parent=5 // pred_region
        %s775 = ssub.s32 %s16, 2
        // Predicated region
        $region57: #{dcgru_cell.1} parent=55 // pred_check
          %p776 = pneg %p202
        $region58: #{dcgru_cell.1} parent=55 // pred_check_branch
          %778 = sbr.rel (%p776) target = $region60
        $region59: #{dcgru_cell.1} parent=55 // pred_region
          %s779 = sand.u32 %s187, 1
          %s780 = scalar_lea.sflag [#allocation3], %s779
          %s781 = sand.u32 %s187, 1
          %s782 = smul.addr %s781, 16
          %s783 = scalar_lea.vmem [#allocation2], %s782
          %784 = dma.done %s780, 256
        $region60: #{dcgru_cell.1} parent=55 // pred_fallthru
          _
      $region56: #{dcgru_cell.1} parent=5 // pred_fallthru
        _
    $region6: #{dcgru_cell.1} parent=1 // loop_footer
      %s20 = sadd.s32 1, %s16
    $region7: #{dcgru_cell.1} parent=1 // loop_footer_branch
      %15 = sbr.rel target = $region3
    $region8: #{dcgru_cell.1} parent=1 // loop_exit
      _
    %785 = vsyncpa [#allocation3], 1
    %s786 = scalar_lea.sflag [#allocation3], 1
    %787 = vsyncpa %s786, 1

</llo_original>
